<compile_context>
chip_gen: v6e
topology: v6e:2x2x1
jax: 0.10.0
libtpu: 0.0.40
codegen_flags: <defaults>
</compile_context>

<pallas_src>
import math

import jax
import jax.numpy as jnp
from jax.experimental import pallas as pl
from jax.experimental.pallas import tpu as pltpu


def _scale_kernel(scales_ref, x_ref, o_ref):
    # scales_ref: VMEM (TB, 1) f32 per-row scales for this tile
    # x_ref / o_ref: VMEM (TB, TN) tile of the flattened input/output
    s = scales_ref[...]                          # (TB, 1) f32, read once per tile
    x = x_ref[...].astype(jnp.float32)           # f32 multiply (exact for f32,
    o_ref[...] = (x * s).astype(o_ref.dtype)     # single rounding for bf16)


def log_truncnormal_sampling_fn(key, n, loc=0.0, scale=0.5, truncation=3.0):
    """JAX equivalent of padertorch's log_truncnormal_sampling_fn."""
    # TODO(synk): matches the PyTorch/scipy truncnorm sampler in distribution only,
    # not bitwise.
    z = jax.random.truncated_normal(
        key, -truncation, truncation, shape=(n,), dtype=jnp.float32
    )
    return jnp.exp(loc + scale * z)


def _round_up(a, b):
    return (a + b - 1) // b * b


def _choose_row_fold(B, N, tb_target):
    """Pick `rows` (a divisor of N) so B*rows fills the native sublane tile.

    Returns 1 (no fold) when B is already large enough or N is too small /
    has no suitable divisor.
    """
    if B >= tb_target or N < 256:
        return 1
    need = -(-tb_target // B)                       # ceil(tb_target / B)
    fallback = 1
    for rows in range(need, min(N // 128, 8 * need) + 1):
        if N % rows != 0:
            continue
        if (N // rows) % 128 == 0:                  # lane-dense rows: ideal
            return rows
        if fallback == 1:
            fallback = rows                         # still >= 128 lanes/row
    return fallback


def scale_forward(x, key, training=True, donate_input=False):
    """Forward pass of Scale. x: (B, ...) of any rank >= 1."""
    if not training:
        return x

    B = x.shape[0]
    N = math.prod(x.shape[1:]) if x.ndim > 1 else 1
    scales = log_truncnormal_sampling_fn(key, B)                # (B,) f32

    itemsize = jnp.dtype(x.dtype).itemsize
    # Dtype-aware sublane tile: 8 rows f32, 16 bf16, 32 int8/fp8.
    tb_target = max(8, 32 // itemsize)

    # Fold inner rows into the sublane dim when B alone can't fill the tile.
    rows = _choose_row_fold(B, N, tb_target)
    R = B * rows
    N_row = N // rows
    x2 = x.reshape(R, N_row)                                    # lane-dense view
    scales_rows = jnp.repeat(scales, rows) if rows > 1 else scales
    scales2 = scales_rows.reshape(R, 1)

    TB = R if R < tb_target else tb_target

    # Inner tile: large multiple of 128, ~8 MiB per array. Double-buffered
    # in+out working set ~= 4 * tile = 32 MiB, within the explicit 48 MiB
    # scoped-VMEM limit below (and under v7x's 64 MiB physical VMEM).
    target_tile_bytes = 8 * 1024 * 1024
    tn_cap = max(128, (target_tile_bytes // (TB * itemsize)) // 128 * 128)
    if N_row >= 128:
        TN = min(_round_up(N_row, 128), tn_cap)
    else:
        TN = N_row  # degenerate tiny rows (e.g. x.ndim == 1): full-dim block

    grid_i = pl.cdiv(R, TB)
    if grid_i == 1:
        # Keep >=2 (up to 4) j-steps on large inputs so v7x can shard the grid
        # across its 2 TensorCores; never shrink a tile below ~512 KiB.
        min_tile_bytes = 512 * 1024
        max_steps = max(1, min(4, (N_row * itemsize) // min_tile_bytes))
        if max_steps > 1:
            tn_split = max(128, _round_up(-(-N_row // max_steps), 128))
            TN = min(TN, tn_split)

    grid = (grid_i, pl.cdiv(N_row, TN))

    grid_spec = pltpu.PrefetchScalarGridSpec(
        num_scalar_prefetch=0,
        grid=grid,
        in_specs=[
            pl.BlockSpec((TB, 1), lambda i, j: (i, 0)),     # per-row scales
            pl.BlockSpec((TB, TN), lambda i, j: (i, j)),    # x tile
        ],
        out_specs=pl.BlockSpec((TB, TN), lambda i, j: (i, j)),
    )

    cost = pl.CostEstimate(
        flops=B * N,
        transcendentals=0,
        bytes_accessed=2 * B * N * itemsize + R * 4,
    )

    out2 = pl.pallas_call(
        _scale_kernel,
        out_shape=jax.ShapeDtypeStruct((R, N_row), x.dtype),
        grid_spec=grid_spec,
        compiler_params=pltpu.CompilerParams(
            dimension_semantics=("parallel", "parallel"),
            vmem_limit_bytes=48 * 1024 * 1024,
        ),
        cost_estimate=cost,
        # Alias x's buffer onto the output only when the caller no longer
        # needs x (halves peak HBM footprint for large activations).
        input_output_aliases={1: 0} if donate_input else {},
    )(scales2, x2)

    return out2.reshape(x.shape)


if __name__ == "__main__":
    key = jax.random.PRNGKey(0)
    k_x, k_scale = jax.random.split(key)

    B, C, H, W = 2, 4, 16, 16
    x = jax.random.normal(k_x, (B, C, H, W), dtype=jnp.float32)

    # Pallas kernel (training=True path: per-batch multiplicative scaling)
    y = scale_forward(x, k_scale, training=True)
    y = jax.block_until_ready(y)

    # Reference in plain JAX
    scales_ref = log_truncnormal_sampling_fn(k_scale, B)
    y_ref = x * scales_ref[:, None, None, None]

    assert y.shape == x.shape and y.dtype == x.dtype
    assert jnp.allclose(y, y_ref, rtol=1e-6, atol=1e-6), "f32 mismatch vs reference"

    # bf16 path exercises dtype-aware sublane tiling (TB=16) + row folding.
    x_bf = x.astype(jnp.bfloat16)
    y_bf = scale_forward(x_bf, k_scale, training=True)
    y_bf = jax.block_until_ready(y_bf)
    y_bf_ref = (x_bf.astype(jnp.float32) * scales_ref[:, None, None, None]).astype(
        jnp.bfloat16
    )
    assert y_bf.shape == x.shape and y_bf.dtype == jnp.bfloat16
    assert jnp.allclose(
        y_bf.astype(jnp.float32), y_bf_ref.astype(jnp.float32), rtol=2e-2, atol=2e-2
    ), "bf16 mismatch vs reference"

    # Eval mode is identity
    y_eval = scale_forward(x, k_scale, training=False)
    assert jnp.array_equal(y_eval, x)

    print("KERNEL_OK")
</pallas_src>

<mosaic_0001>
module attributes {stable_mosaic.version = 11 : i64} {
  func.func @_scale_kernel(%arg0: i32, %arg1: i32, %arg2: memref<8x1xf32, #tpu.memory_space<vmem>>, %arg3: memref<8x256xf32, #tpu.memory_space<vmem>>, %arg4: memref<8x256xf32, #tpu.memory_space<vmem>>) attributes {dimension_semantics = [#tpu.dimension_semantics<parallel>, #tpu.dimension_semantics<parallel>], iteration_bounds = array<i64: 1, 1>, scalar_prefetch = 0 : i64, scratch_operands = 0 : i64, tpu.core_type = #tpu.core_type<tc>, window_params = [{transform_indices = @transform_0, window_bounds = array<i64: 8, 1>}, {transform_indices = @transform_1, window_bounds = array<i64: 8, 256>}, {transform_indices = @transform_2, window_bounds = array<i64: 8, 256>}]} {
    %c0 = arith.constant 0 : index
    %c0_0 = arith.constant 0 : index
    %0 = vector.load %arg2[%c0, %c0_0] : memref<8x1xf32, #tpu.memory_space<vmem>>, vector<8x1xf32>
    %c0_1 = arith.constant 0 : index
    %c0_2 = arith.constant 0 : index
    %1 = vector.load %arg3[%c0_1, %c0_2] : memref<8x256xf32, #tpu.memory_space<vmem>>, vector<8x256xf32>
    %2 = vector.broadcast %0 : vector<8x1xf32> to vector<8x256xf32>
    %3 = arith.mulf %1, %2 : vector<8x256xf32>
    %c0_3 = arith.constant 0 : index
    %c0_4 = arith.constant 0 : index
    %4 = vector.load %arg4[%c0_3, %c0_4] : memref<8x256xf32, #tpu.memory_space<vmem>>, vector<8x256xf32>
    tpu.vector_store %arg4[%c0_3, %c0_4], %3 {strides = array<i32>} : memref<8x256xf32, #tpu.memory_space<vmem>>, vector<8x256xf32>,
    return
  }
  func.func @transform_0(%arg0: i32, %arg1: i32) -> (i32, i32) {
    %c0_i32 = arith.constant 0 : i32
    %c0_i32_0 = arith.constant 0 : i32
    return %arg0, %c0_i32 : i32, i32
  }
  func.func @transform_1(%arg0: i32, %arg1: i32) -> (i32, i32) {
    %c0_i32 = arith.constant 0 : i32
    return %arg0, %arg1 : i32, i32
  }
  func.func @transform_2(%arg0: i32, %arg1: i32) -> (i32, i32) {
    %c0_i32 = arith.constant 0 : i32
    return %arg0, %arg1 : i32, i32
  }
}

</mosaic_0001>

<llo_original>
// kernel: tpu_custom_call.1
$region0: #{tpu_custom_call.1}
  #allocation0 [shape = 'u32[]', space=smem, size = 0x4, offset = 0x4, fixed_abs, tag = 'smem constant byte address 0x4 - core index']
  #allocation1 [shape = 'u32[144,128]{1,0:T(1,128)}', space=vmem, size = 0x12000, scoped, tag = 'internal scratch']
  %s0 = inlined_call_operand.vmem [shape: f32[8,1], index: 0, kind: input, shape index: {}]
  %s1 = inlined_call_operand.hbm [shape: f32[8,256], index: 1, kind: input, shape index: {}]
  %s2 = inlined_call_operand.hbm [shape: f32[8,256], index: 2, kind: output, shape index: {}]
  %s3 = sld [smem:[#allocation0]]
  $region22: #{tpu_custom_call.1} parent=0
    _
  %s5 = ssub.s32 1, %s3
  %s6 = scalar_select 0, %s5, %s3
  $region1: #{tpu_custom_call.1} parent=0
    #allocation2 [shape = 'u8[8192]{0}', space=vmem, size = 0x2000, scoped, tag = 'input window, operand 1, single buffered']
    #allocation3 [shape = 's32[1]{0}', space=sflag, size = 0x4, scoped, tag = 'scoped memory for tpu_custom_call.1']
    #allocation4 [shape = 's32[1]{0}', space=sflag, size = 0x4, scoped, tag = 'scoped memory for tpu_custom_call.1']
    #allocation5 [shape = 'u8[8192]{0}', space=vmem, size = 0x2000, scoped, tag = 'output window, operand 0, single buffered']
    %7 = vsyncpa [#allocation3], 0
    %8 = vsyncpa [#allocation4], 0
    // Predicated region
    $region2: #{tpu_custom_call.1} parent=1 // pred_check
      _
    $region3: #{tpu_custom_call.1} parent=1 // pred_check_branch
      %10 = sbr.rel (0) target = $region5
    $region4: #{tpu_custom_call.1} parent=1 // pred_region
      _
    $region5: #{tpu_custom_call.1} parent=1 // pred_fallthru
      _
    // Predicated region
    $region6: #{tpu_custom_call.1} parent=1 // pred_check
      _
    $region7: #{tpu_custom_call.1} parent=1 // pred_check_branch
      %12 = sbr.rel (0) target = $region9
    $region8: #{tpu_custom_call.1} parent=1 // pred_region
      %s14 = ssub.s32 256, 256
      %15 = vsyncadd [#allocation3], %s14
      %s17 = sshll.u32 [#allocation2], 4
      %s18 = int_to_ptr.vmem [resolvable:$true] %s17
      %20 = dma.hbm_to_vmem [thread:$0]  %s1, 256, %s18, [#allocation3]
    $region9: #{tpu_custom_call.1} parent=1 // pred_fallthru
      _
    // Predicated region
    $region10: #{tpu_custom_call.1} parent=1 // pred_check
      _
    $region11: #{tpu_custom_call.1} parent=1 // pred_check_branch
      %22 = sbr.rel (0) target = $region13
    $region12: #{tpu_custom_call.1} parent=1 // pred_region
      %23 = dma.done [#allocation3], 256
    $region13: #{tpu_custom_call.1} parent=1 // pred_fallthru
      _
    %v24 = vld [vmem:[%s0] sm:$0xff]
    %v25 = vld [vmem:[#allocation2] sm:$0xff]
    %v26 = vld [vmem:[#allocation2 + $0x8] sm:$0xff]
    %28 = vset.pattern.permute.xlu0 0
    %29 = vperm.xlu0 %28, %v24
    %v30 = vpop.permute.xlu0 %29
    %v32 = vmul.f32 %v25, %v30
    %v33 = vmul.f32 %v26, %v30
    %34 = vst [vmem:[#allocation5] sm:$0xff] %v32
    %35 = vst [vmem:[#allocation5 + $0x8] sm:$0xff] %v33
    // Predicated region
    $region14: #{tpu_custom_call.1} parent=1 // pred_check
      _
    $region15: #{tpu_custom_call.1} parent=1 // pred_check_branch
      %37 = sbr.rel (0) target = $region17
    $region16: #{tpu_custom_call.1} parent=1 // pred_region
      %s39 = ssub.s32 256, 256
      %40 = vsyncadd [#allocation4], %s39
      %s42 = sshll.u32 [#allocation5], 4
      %s43 = int_to_ptr.vmem [resolvable:$true] %s42
      %45 = dma.vmem_to_hbm [thread:$0]  %s43, 256, %s2, [#allocation4]
    $region17: #{tpu_custom_call.1} parent=1 // pred_fallthru
      _
    // Predicated region
    $region18: #{tpu_custom_call.1} parent=1 // pred_check
      _
    $region19: #{tpu_custom_call.1} parent=1 // pred_check_branch
      %47 = sbr.rel (0) target = $region21
    $region20: #{tpu_custom_call.1} parent=1 // pred_region
      %48 = dma.done [#allocation4], 256
    $region21: #{tpu_custom_call.1} parent=1 // pred_fallthru
      _
    %49 = vsyncpa [#allocation3], 1
    %50 = vsyncpa [#allocation4], 1

</llo_original>
